<compile_context>
chip_gen: v7x
topology: tpu7x:2x2x1
jax: 0.10.0
libtpu: 0.0.40
codegen_flags: <defaults>
</compile_context>

<pallas_src>
import jax
import jax.numpy as jnp
from jax.experimental import pallas as pl
from jax.experimental.pallas import tpu as pltpu


def _lsoft_kernel(beta_ref, y_pred_ref, y_true_ref, out_ref):
    beta = beta_ref[0]
    one_minus_beta = 1.0 - beta          # hoisted scalar algebra

    x = y_pred_ref[...]
    z = y_true_ref[...]

    # Single EUP exp per element, reused for sigmoid and the stable BCE tail.
    e = jnp.exp(-jnp.abs(x))             # e = exp(-|x|) in (0, 1]
    inv = 1.0 / (1.0 + e)                # exact reciprocal (keeps 1e-5 accuracy)
    sig = jnp.where(x >= 0.0, inv, e * inv)   # sigmoid(x)

    # no_grad target construction (forward semantics only).
    z_upd = (beta * z + one_minus_beta * sig) * z

    # BCEWithLogitsLoss(reduction='none'), numerically stable.
    out_ref[...] = jnp.maximum(x, 0.0) - x * z_upd + jnp.log1p(e)


def lsoft_loss(y_pred, y_true, beta, *, target_block_bytes=2 * 1024 * 1024):
    """Elementwise L-soft BCE-with-logits loss (reduction='none').

    y_pred, y_true: same-shape arrays (any shape); beta: python float / 0-d.
    Returns float32 loss with the same shape as the inputs.
    """
    assert y_pred.shape == y_true.shape
    orig_shape = y_pred.shape

    yp = y_pred.astype(jnp.float32)
    yt = y_true.astype(jnp.float32)

    # Present a lane-dense 2-D slab to the kernel.
    if yp.ndim == 2 and yp.shape[1] % 128 == 0 and yp.shape[1] > 0:
        rows, width = yp.shape
        yp2, yt2 = yp, yt
        flattened = False
    else:
        # Flatten + pad to (rows, 1024) so stores are unmasked full-lane vst.
        width = 1024
        total = yp.size
        rows = -(-total // width)
        pad = rows * width - total
        yp2 = jnp.pad(jnp.ravel(yp), (0, pad)).reshape(rows, width)
        yt2 = jnp.pad(jnp.ravel(yt), (0, pad)).reshape(rows, width)
        flattened = True

    # Rows per block: ~target_block_bytes per array, multiple of 8 (sublane),
    # or the full row count when it is small.
    bytes_per_row = width * 4
    if rows <= 8:
        tile_m = rows
    else:
        tile_m = min(rows, max(8, target_block_bytes // bytes_per_row))
        tile_m = max(8, (tile_m // 8) * 8)
    grid = (pl.cdiv(rows, tile_m),)

    beta_arr = jnp.asarray(beta, dtype=jnp.float32).reshape((1,))

    grid_spec = pltpu.PrefetchScalarGridSpec(
        num_scalar_prefetch=1,
        grid=grid,
        in_specs=[
            pl.BlockSpec((tile_m, width), lambda i, beta_ref: (i, 0)),
            pl.BlockSpec((tile_m, width), lambda i, beta_ref: (i, 0)),
        ],
        out_specs=pl.BlockSpec((tile_m, width), lambda i, beta_ref: (i, 0)),
    )

    out = pl.pallas_call(
        _lsoft_kernel,
        grid_spec=grid_spec,
        out_shape=jax.ShapeDtypeStruct((rows, width), jnp.float32),
        compiler_params=pltpu.CompilerParams(
            # Single grid axis, independent blocks -> shardable across the
            # 2 TensorCores on v7x; no vmem_limit override needed: 3 arrays
            # x 2 buffers x ~2 MiB = ~12 MiB fits even v5e's 16 MiB default.
            dimension_semantics=("parallel",),
        ),
    )(beta_arr, yp2, yt2)

    if flattened:
        out = jnp.ravel(out)[: yp.size].reshape(orig_shape)
    return out


def _lsoft_loss_ref(y_pred, y_true, beta):
    sig = jax.nn.sigmoid(y_pred)
    z_upd = (beta * y_true + (1.0 - beta) * sig) * y_true
    return (jnp.maximum(y_pred, 0.0) - y_pred * z_upd
            + jnp.log1p(jnp.exp(-jnp.abs(y_pred))))


if __name__ == "__main__":
    key = jax.random.PRNGKey(0)
    k1, k2 = jax.random.split(key)

    M, N = 16, 256  # (batch, num_classes)
    y_pred = jax.random.normal(k1, (M, N), dtype=jnp.float32) * 3.0
    # multi-label {0,1} targets
    y_true = (jax.random.uniform(k2, (M, N)) > 0.5).astype(jnp.float32)
    beta = 0.7

    out = lsoft_loss(y_pred, y_true, beta)
    out = jax.block_until_ready(out)

    ref = _lsoft_loss_ref(y_pred, y_true, beta)
    assert out.shape == (M, N)
    assert jnp.allclose(out, ref, atol=1e-5, rtol=1e-5), "mismatch vs reference"

    print("KERNEL_OK")
</pallas_src>

<mosaic_0001>
module attributes {stable_mosaic.version = 11 : i64} {
  func.func @_lsoft_kernel(%arg0: i32, %arg1: memref<1xf32, #tpu.memory_space<smem>>, %arg2: memref<16x256xf32, #tpu.memory_space<vmem>>, %arg3: memref<16x256xf32, #tpu.memory_space<vmem>>, %arg4: memref<16x256xf32, #tpu.memory_space<vmem>>) attributes {dimension_semantics = [#tpu.dimension_semantics<parallel>], iteration_bounds = array<i64: 1>, scalar_prefetch = 1 : i64, scratch_operands = 0 : i64, tpu.core_type = #tpu.core_type<tc>, window_params = [{transform_indices = @transform_0, window_bounds = array<i64: 16, 256>}, {transform_indices = @transform_1, window_bounds = array<i64: 16, 256>}, {transform_indices = @transform_2, window_bounds = array<i64: 16, 256>}]} {
    %c0 = arith.constant 0 : index
    %0 = memref.load %arg1[%c0] : memref<1xf32, #tpu.memory_space<smem>>
    %cst = arith.constant 1.000000e+00 : f32
    %1 = arith.subf %cst, %0 : f32
    %c0_0 = arith.constant 0 : index
    %c0_1 = arith.constant 0 : index
    %2 = vector.load %arg2[%c0_0, %c0_1] : memref<16x256xf32, #tpu.memory_space<vmem>>, vector<16x256xf32>
    %c0_2 = arith.constant 0 : index
    %c0_3 = arith.constant 0 : index
    %3 = vector.load %arg3[%c0_2, %c0_3] : memref<16x256xf32, #tpu.memory_space<vmem>>, vector<16x256xf32>
    %4 = math.absf %2 : vector<16x256xf32>
    %cst_4 = arith.constant 0.000000e+00 : f32
    %5 = vector.broadcast %cst_4 : f32 to vector<16x256xf32>
    %6 = arith.subf %5, %4 : vector<16x256xf32>
    %7 = math.exp %6 : vector<16x256xf32>
    %cst_5 = arith.constant 1.000000e+00 : f32
    %8 = vector.broadcast %cst_5 : f32 to vector<16x256xf32>
    %9 = arith.addf %8, %7 : vector<16x256xf32>
    %cst_6 = arith.constant 1.000000e+00 : f32
    %10 = vector.broadcast %cst_6 : f32 to vector<16x256xf32>
    %11 = arith.divf %10, %9 : vector<16x256xf32>
    %cst_7 = arith.constant 0.000000e+00 : f32
    %12 = vector.broadcast %cst_7 : f32 to vector<16x256xf32>
    %13 = arith.cmpf oge, %2, %12 : vector<16x256xf32>
    %14 = arith.mulf %7, %11 : vector<16x256xf32>
    %15 = arith.select %13, %11, %14 : vector<16x256xi1>, vector<16x256xf32>
    %16 = vector.broadcast %0 : f32 to vector<16x256xf32>
    %17 = arith.mulf %16, %3 : vector<16x256xf32>
    %18 = vector.broadcast %1 : f32 to vector<16x256xf32>
    %19 = arith.mulf %18, %15 : vector<16x256xf32>
    %20 = arith.addf %17, %19 : vector<16x256xf32>
    %21 = arith.mulf %20, %3 : vector<16x256xf32>
    %cst_8 = arith.constant 0.000000e+00 : f32
    %22 = vector.broadcast %cst_8 : f32 to vector<16x256xf32>
    %23 = arith.maximumf %2, %22 : vector<16x256xf32>
    %24 = arith.mulf %2, %21 : vector<16x256xf32>
    %25 = arith.subf %23, %24 : vector<16x256xf32>
    %26 = math.log1p %7 : vector<16x256xf32>
    %27 = arith.addf %25, %26 : vector<16x256xf32>
    %c0_9 = arith.constant 0 : index
    %c0_10 = arith.constant 0 : index
    %28 = vector.load %arg4[%c0_9, %c0_10] : memref<16x256xf32, #tpu.memory_space<vmem>>, vector<16x256xf32>
    tpu.vector_store %arg4[%c0_9, %c0_10], %27 {strides = array<i32>} : memref<16x256xf32, #tpu.memory_space<vmem>>, vector<16x256xf32>,
    return
  }
  func.func @transform_0(%arg0: i32, %arg1: memref<1xf32, #tpu.memory_space<smem>>) -> (i32, i32) {
    %c0_i32 = arith.constant 0 : i32
    %c0_i32_0 = arith.constant 0 : i32
    return %arg0, %c0_i32 : i32, i32
  }
  func.func @transform_1(%arg0: i32, %arg1: memref<1xf32, #tpu.memory_space<smem>>) -> (i32, i32) {
    %c0_i32 = arith.constant 0 : i32
    %c0_i32_0 = arith.constant 0 : i32
    return %arg0, %c0_i32 : i32, i32
  }
  func.func @transform_2(%arg0: i32, %arg1: memref<1xf32, #tpu.memory_space<smem>>) -> (i32, i32) {
    %c0_i32 = arith.constant 0 : i32
    %c0_i32_0 = arith.constant 0 : i32
    return %arg0, %c0_i32 : i32, i32
  }
}

</mosaic_0001>

<llo_original>
// kernel: tpu_custom_call.1
$region0: #{tpu_custom_call.1}
  #allocation0 [shape = 'u32[]', space=smem, size = 0x4, offset = 0x4, fixed_abs, tag = 'smem constant byte address 0x4 - core index']
  #allocation1 [shape = 'u32[144,128]{1,0:T(1,128)}', space=vmem, size = 0x12000, scoped, tag = 'internal scratch']
  #allocation2 [shape = 's32[1]{0}', space=sflag, size = 0x4, scoped, tag = 'scoped memory for tpu_custom_call.1']
  #allocation3 [shape = 'f32[1]{0:T(128)S(6)}', space=smem, size = 0x200, scoped, tag = 'prefetched SMEM operand 0']
  %s0 = inlined_call_operand.<no memory space> [shape: f32[1], index: 0, kind: input, shape index: {}]
  %s1 = inlined_call_operand.hbm [shape: f32[16,256], index: 1, kind: input, shape index: {}]
  %s2 = inlined_call_operand.hbm [shape: f32[16,256], index: 2, kind: input, shape index: {}]
  %s3 = inlined_call_operand.hbm [shape: f32[16,256], index: 3, kind: output, shape index: {}]
  %s4 = sld [smem:[#allocation0]]
  $region26: #{tpu_custom_call.1} parent=0
    _
  %s6 = ssub.s32 1, %s4
  %s7 = scalar_select 0, %s6, %s4
  %8 = sst [smem:[#allocation3]] %s0
  $region1: #{tpu_custom_call.1} parent=0
    #allocation4 [shape = 'u8[16384]{0}', space=vmem, size = 0x4000, scoped, tag = 'input window, operand 1, single buffered']
    #allocation5 [shape = 's32[1]{0}', space=sflag, size = 0x4, scoped, tag = 'scoped memory for tpu_custom_call.1']
    #allocation6 [shape = 's32[1]{0}', space=sflag, size = 0x4, scoped, tag = 'scoped memory for tpu_custom_call.1']
    #allocation7 [shape = 'u8[16384]{0}', space=vmem, size = 0x4000, scoped, tag = 'input window, operand 2, single buffered']
    #allocation8 [shape = 's32[1]{0}', space=sflag, size = 0x4, scoped, tag = 'scoped memory for tpu_custom_call.1']
    #allocation9 [shape = 'u8[16384]{0}', space=vmem, size = 0x4000, scoped, tag = 'output window, operand 0, single buffered']
    %9 = vsyncpa [#allocation5], 0
    %10 = vsyncpa [#allocation8], 0
    %11 = vsyncpa [#allocation6], 0
    // Predicated region
    $region2: #{tpu_custom_call.1} parent=1 // pred_check
      _
    $region3: #{tpu_custom_call.1} parent=1 // pred_check_branch
      %13 = sbr.rel (0) target = $region5
    $region4: #{tpu_custom_call.1} parent=1 // pred_region
      %s15 = ssub.s32 512, 512
      %16 = vsyncadd [#allocation5], %s15
      %s17 = sshll.u32 [#allocation4], 4
      %s18 = int_to_ptr.vmem [resolvable:$true] %s17
      %23 = dma.hbm_to_vmem [thread:$0]  %s1, 512, %s18, [#allocation5], 256, 256, 16
    $region5: #{tpu_custom_call.1} parent=1 // pred_fallthru
      _
    // Predicated region
    $region6: #{tpu_custom_call.1} parent=1 // pred_check
      _
    $region7: #{tpu_custom_call.1} parent=1 // pred_check_branch
      %25 = sbr.rel (0) target = $region9
    $region8: #{tpu_custom_call.1} parent=1 // pred_region
      %s27 = ssub.s32 512, 512
      %28 = vsyncadd [#allocation8], %s27
      %s29 = sshll.u32 [#allocation7], 4
      %s30 = int_to_ptr.vmem [resolvable:$true] %s29
      %35 = dma.hbm_to_vmem [thread:$0]  %s2, 512, %s30, [#allocation8], 256, 256, 16
    $region9: #{tpu_custom_call.1} parent=1 // pred_fallthru
      _
    // Predicated region
    $region10: #{tpu_custom_call.1} parent=1 // pred_check
      _
    $region11: #{tpu_custom_call.1} parent=1 // pred_check_branch
      %37 = sbr.rel (0) target = $region13
    $region12: #{tpu_custom_call.1} parent=1 // pred_region
      %38 = dma.done [#allocation5], 512
    $region13: #{tpu_custom_call.1} parent=1 // pred_fallthru
      _
    // Predicated region
    $region14: #{tpu_custom_call.1} parent=1 // pred_check
      _
    $region15: #{tpu_custom_call.1} parent=1 // pred_check_branch
      %40 = sbr.rel (0) target = $region17
    $region16: #{tpu_custom_call.1} parent=1 // pred_region
      %41 = dma.done [#allocation8], 512
    $region17: #{tpu_custom_call.1} parent=1 // pred_fallthru
      _
    %s42 = sld [smem:[#allocation3]]
    %s43 = ssub.f32 1.0, %s42
    %v44 = vld [vmem:[#allocation4] sm:$0xff]
    %v45 = vld [vmem:[#allocation4 + $0x8] sm:$0xff]
    %v46 = vld [vmem:[#allocation4 + $0x10] sm:$0xff]
    %v47 = vld [vmem:[#allocation4 + $0x18] sm:$0xff]
    %v48 = vld [vmem:[#allocation7] sm:$0xff]
    %v49 = vld [vmem:[#allocation7 + $0x8] sm:$0xff]
    %v50 = vld [vmem:[#allocation7 + $0x10] sm:$0xff]
    %v51 = vld [vmem:[#allocation7 + $0x18] sm:$0xff]
    %v52 = vand.u32 2147483647, %v44
    %v53 = vand.u32 2147483647, %v45
    %v54 = vand.u32 2147483647, %v46
    %v55 = vand.u32 2147483647, %v47
    %v56 = vsub.f32 0.0, %v52
    %v57 = vsub.f32 0.0, %v53
    %v58 = vsub.f32 0.0, %v54
    %v59 = vsub.f32 0.0, %v55
    %v60 = vmul.f32 %v56, 1.442695
    %v61 = vpow.pop %v60
    %v62 = vmul.f32 %v57, 1.442695
    %v63 = vpow.pop %v62
    %v64 = vmul.f32 %v58, 1.442695
    %v65 = vpow.pop %v64
    %v66 = vmul.f32 %v59, 1.442695
    %v67 = vpow.pop %v66
    %v68 = vadd.f32 %v61, 1.0
    %v69 = vadd.f32 %v63, 1.0
    %v70 = vadd.f32 %v65, 1.0
    %v71 = vadd.f32 %v67, 1.0
    %v72 = vrcp.pop %v68
    %v73 = vmul.f32 1.0, %v72
    %v74 = vrcp.pop %v69
    %v75 = vmul.f32 1.0, %v74
    %v76 = vrcp.pop %v70
    %v77 = vmul.f32 1.0, %v76
    %v78 = vrcp.pop %v71
    %v79 = vmul.f32 1.0, %v78
    %vm80 = vcmp.ge.f32.partialorder %v44, 0.0
    %vm81 = vcmp.ge.f32.partialorder %v45, 0.0
    %vm82 = vcmp.ge.f32.partialorder %v46, 0.0
    %vm83 = vcmp.ge.f32.partialorder %v47, 0.0
    %v84 = vmul.f32 %v61, %v73
    %v85 = vmul.f32 %v63, %v75
    %v86 = vmul.f32 %v65, %v77
    %v87 = vmul.f32 %v67, %v79
    %v88 = vsel %vm80, %v73, %v84
    %v89 = vsel %vm81, %v75, %v85
    %v90 = vsel %vm82, %v77, %v86
    %v91 = vsel %vm83, %v79, %v87
    %v92 = vstv %s42
    %v93 = vmul.f32 %v92, %v48
    %v94 = vmul.f32 %v92, %v49
    %v95 = vmul.f32 %v92, %v50
    %v96 = vmul.f32 %v92, %v51
    %v97 = vstv %s43
    %v98 = vmul.f32 %v97, %v88
    %v99 = vmul.f32 %v97, %v89
    %v100 = vmul.f32 %v97, %v90
    %v101 = vmul.f32 %v97, %v91
    %v102 = vadd.f32 %v93, %v98
    %v103 = vadd.f32 %v94, %v99
    %v104 = vadd.f32 %v95, %v100
    %v105 = vadd.f32 %v96, %v101
    %v106 = vmul.f32 %v102, %v48
    %v107 = vmul.f32 %v103, %v49
    %v108 = vmul.f32 %v104, %v50
    %v109 = vmul.f32 %v105, %v51
    %v110 = vmax.f32 %v44, 0.0
    %v111 = vmax.f32 %v45, 0.0
    %v112 = vmax.f32 %v46, 0.0
    %v113 = vmax.f32 %v47, 0.0
    %v114 = vmul.f32 %v44, %v106
    %v115 = vmul.f32 %v45, %v107
    %v116 = vmul.f32 %v46, %v108
    %v117 = vmul.f32 %v47, %v109
    %v118 = vsub.f32 %v110, %v114
    %v119 = vsub.f32 %v111, %v115
    %v120 = vsub.f32 %v112, %v116
    %v121 = vsub.f32 %v113, %v117
    %v122 = vadd.f32 %v61, 1.0
    %v123 = vlog2.pop %v122
    %v124 = vmul.f32 %v123, 0.6931472
    %v125 = vmul.f32 -0.5, %v61
    %v126 = vadd.f32 %v125, 1.0
    %v127 = vmul.f32 %v126, %v61
    %v128 = vand.u32 2147483647, %v61
    %vm129 = vcmp.lt.f32.partialorder %v128, 0.0004427343
    %v130 = vsel %vm129, %v127, %v124
    %v131 = vadd.f32 %v63, 1.0
    %v132 = vlog2.pop %v131
    %v133 = vmul.f32 %v132, 0.6931472
    %v134 = vmul.f32 -0.5, %v63
    %v135 = vadd.f32 %v134, 1.0
    %v136 = vmul.f32 %v135, %v63
    %v137 = vand.u32 2147483647, %v63
    %vm138 = vcmp.lt.f32.partialorder %v137, 0.0004427343
    %v139 = vsel %vm138, %v136, %v133
    %v140 = vadd.f32 %v65, 1.0
    %v141 = vlog2.pop %v140
    %v142 = vmul.f32 %v141, 0.6931472
    %v143 = vmul.f32 -0.5, %v65
    %v144 = vadd.f32 %v143, 1.0
    %v145 = vmul.f32 %v144, %v65
    %v146 = vand.u32 2147483647, %v65
    %vm147 = vcmp.lt.f32.partialorder %v146, 0.0004427343
    %v148 = vsel %vm147, %v145, %v142
    %v149 = vadd.f32 %v67, 1.0
    %v150 = vlog2.pop %v149
    %v151 = vmul.f32 %v150, 0.6931472
    %v152 = vmul.f32 -0.5, %v67
    %v153 = vadd.f32 %v152, 1.0
    %v154 = vmul.f32 %v153, %v67
    %v155 = vand.u32 2147483647, %v67
    %vm156 = vcmp.lt.f32.partialorder %v155, 0.0004427343
    %v157 = vsel %vm156, %v154, %v151
    %v158 = vadd.f32 %v118, %v130
    %v159 = vadd.f32 %v119, %v139
    %v160 = vadd.f32 %v120, %v148
    %v161 = vadd.f32 %v121, %v157
    %162 = vst [vmem:[#allocation9] sm:$0xff] %v158
    %163 = vst [vmem:[#allocation9 + $0x8] sm:$0xff] %v159
    %164 = vst [vmem:[#allocation9 + $0x10] sm:$0xff] %v160
    %165 = vst [vmem:[#allocation9 + $0x18] sm:$0xff] %v161
    // Predicated region
    $region18: #{tpu_custom_call.1} parent=1 // pred_check
      _
    $region19: #{tpu_custom_call.1} parent=1 // pred_check_branch
      %167 = sbr.rel (0) target = $region21
    $region20: #{tpu_custom_call.1} parent=1 // pred_region
      %s169 = ssub.s32 512, 512
      %170 = vsyncadd [#allocation6], %s169
      %s171 = sshll.u32 [#allocation9], 4
      %s172 = int_to_ptr.vmem [resolvable:$true] %s171
      %177 = dma.vmem_to_hbm [thread:$0]  %s172, 512, %s3, [#allocation6], 256, 256, 16
    $region21: #{tpu_custom_call.1} parent=1 // pred_fallthru
      _
    // Predicated region
    $region22: #{tpu_custom_call.1} parent=1 // pred_check
      _
    $region23: #{tpu_custom_call.1} parent=1 // pred_check_branch
      %179 = sbr.rel (0) target = $region25
    $region24: #{tpu_custom_call.1} parent=1 // pred_region
      %180 = dma.done [#allocation6], 512
    $region25: #{tpu_custom_call.1} parent=1 // pred_fallthru
      _
    %181 = vsyncpa [#allocation5], 1
    %182 = vsyncpa [#allocation8], 1
    %183 = vsyncpa [#allocation6], 1

</llo_original>
